<compile_context>
chip_gen: v5e
topology: v5e:2x2
jax: 0.10.0
libtpu: 0.0.40
codegen_flags: <defaults>
</compile_context>

<pallas_src>
import functools
import math

import jax
import jax.numpy as jnp
from jax.experimental import pallas as pl
from jax.experimental.pallas import tpu as pltpu

_LANE_WIDTH = 512              # lane-dense slab width for the aligned path
_TARGET_BLOCK_BYTES = 2 << 20  # native-dtype bytes per input per grid step
_MAX_BLOCK_BYTES = 8 << 20     # refuse single blocks bigger than this
_SMALL_INPUT_BYTES = 1 << 19   # below this, plain XLA beats kernel launch
_VMEM_LIMIT_BYTES = 40 * 1024 * 1024


def _num_tensorcore_parts():
    """2 on chips with two TensorCores per chip (megacore), else 1."""
    try:
        kind = jax.devices()[0].device_kind.lower()
    except Exception:  # pragma: no cover - defensive
        return 1
    if any(tag in kind for tag in ("v7", "7x", "v4", "v5p")):
        return 2
    return 1


def _mse_kernel(o_ref, t_ref, loss_ref, acc_ref, *,
                tile_rows, valid_rows, blocks_per_part):
    p = pl.program_id(0)   # megacore part
    i = pl.program_id(1)   # row-block step within this part

    @pl.when(i == 0)
    def _():
        acc_ref[...] = jnp.zeros_like(acc_ref)

    # Logical (unclamped) row-block handled this step.
    blk = p * blocks_per_part + i
    row0 = blk * tile_rows
    needs_mask = row0 + tile_rows > valid_rows

    @pl.when(jnp.logical_not(needs_mask))
    def _():
        # Interior block: every row is valid -- no mask work at all.
        d = o_ref[...].astype(jnp.float32) - t_ref[...].astype(jnp.float32)
        acc_ref[...] += jnp.sum(d * d, axis=0, keepdims=True)

    @pl.when(needs_mask)
    def _():
        # Edge block (partial rows) or clamped duplicate block: rows at or
        # past `valid_rows` are garbage / already counted -- zero them before
        # squaring so NaN/Inf cannot leak into the sum.
        d = o_ref[...].astype(jnp.float32) - t_ref[...].astype(jnp.float32)
        row_ids = row0 + jax.lax.broadcasted_iota(jnp.int32, d.shape, 0)
        d = jnp.where(row_ids < valid_rows, d, jnp.float32(0.0))
        acc_ref[...] += jnp.sum(d * d, axis=0, keepdims=True)

    @pl.when(i == pl.num_programs(1) - 1)
    def _():
        loss_ref[0, 0] = jnp.sum(acc_ref[...])


def _jnp_mse(output, target):
    d = output.astype(jnp.float32) - target.astype(jnp.float32)
    return jnp.mean(d * d)


def age_mse_loss(output, target, *, force_pallas=False):
    """mean((output - target)**2) -- matches nn.MSELoss(size_average=True)."""
    assert output.shape == target.shape, "MSELoss requires matching shapes"
    total = output.size

    if total == 0:
        # torch.nn.MSELoss(mean) over an empty tensor is NaN.
        return jnp.float32(jnp.nan)

    o_item = jnp.dtype(output.dtype).itemsize
    t_item = jnp.dtype(target.dtype).itemsize
    itemsize = max(o_item, t_item)

    if not force_pallas and total * itemsize < _SMALL_INPUT_BYTES:
        # Small regression heads (the usual AgeMSELoss case): XLA fusion
        # beats kernel launch overhead.
        return _jnp_mse(output, target)

    # --- choose a copy-free 2-D view of the inputs --------------------------
    if total % _LANE_WIDTH == 0:
        rows, cols = total // _LANE_WIDTH, _LANE_WIDTH        # lane-dense
    elif output.ndim >= 2:
        rows, cols = math.prod(output.shape[:-1]), output.shape[-1]
    else:
        # Unaligned 0-D/1-D: no copy-free 2-D view; let XLA handle it.
        return _jnp_mse(output, target)

    # --- dtype-aware block size (~_TARGET_BLOCK_BYTES native per input) -----
    target_rows = max(8, (_TARGET_BLOCK_BYTES // (cols * itemsize)) // 8 * 8)
    tile_rows = rows if target_rows >= rows else target_rows
    if tile_rows * cols * itemsize > _MAX_BLOCK_BYTES:
        # e.g. one enormous row: even the minimal legal block would not fit.
        return _jnp_mse(output, target)

    o2 = output.reshape(rows, cols)   # free reshape (contiguous, no copy)
    t2 = target.reshape(rows, cols)

    num_row_blocks = pl.cdiv(rows, tile_rows)
    num_parts = min(_num_tensorcore_parts(), num_row_blocks)
    blocks_per_part = pl.cdiv(num_row_blocks, num_parts)
    grid = (num_parts, blocks_per_part)

    def in_map(p, i):
        # Clamp so the DMA never walks past the array; clamped (duplicate)
        # blocks are fully masked inside the kernel and contribute 0.
        return (jnp.minimum(p * blocks_per_part + i, num_row_blocks - 1), 0)

    kernel = functools.partial(
        _mse_kernel, tile_rows=tile_rows, valid_rows=rows,
        blocks_per_part=blocks_per_part)

    partials = pl.pallas_call(
        kernel,
        out_shape=jax.ShapeDtypeStruct((num_parts, 1), jnp.float32),
        grid_spec=pltpu.PrefetchScalarGridSpec(
            num_scalar_prefetch=0,
            grid=grid,
            in_specs=[
                pl.BlockSpec((tile_rows, cols), in_map),
                pl.BlockSpec((tile_rows, cols), in_map),
            ],
            out_specs=pl.BlockSpec((1, 1), lambda p, i: (p, 0),
                                   memory_space=pltpu.SMEM),
            scratch_shapes=[pltpu.VMEM((1, cols), jnp.float32)],
        ),
        compiler_params=pltpu.CompilerParams(
            dimension_semantics=("parallel", "arbitrary"),
            vmem_limit_bytes=_VMEM_LIMIT_BYTES),
        cost_estimate=pl.CostEstimate(
            flops=3 * total, transcendentals=0,
            bytes_accessed=total * (o_item + t_item) + 4 * num_parts),
    )(o2, t2)

    return jnp.sum(partials) / jnp.float32(total)


if __name__ == "__main__":
    key = jax.random.PRNGKey(0)
    k1, k2, k3, k4, k5, k6 = jax.random.split(key, 6)

    # 1) Small regression-head-shaped input, forced through the kernel
    #    (aligned path, single full-extent block).  The default small-input
    #    fast path would otherwise bypass the kernel at this size.
    out_s = jax.random.normal(k1, (2, 4, 16, 16), dtype=jnp.float32)
    tgt_s = jax.random.normal(k2, (2, 4, 16, 16), dtype=jnp.float32)
    loss_s = jax.block_until_ready(age_mse_loss(out_s, tgt_s, force_pallas=True))
    ref_s = jnp.mean((out_s - tgt_s) ** 2)
    assert jnp.allclose(loss_s, ref_s, rtol=1e-5, atol=1e-6), (loss_s, ref_s)

    # 2) f32, 512-aligned total: lane-dense (rows, 512) slab, multiple row
    #    blocks and a masked partial edge block (1500 rows, 1024-row tiles).
    out_m = jax.random.normal(k3, (2, 3, 250, 512), dtype=jnp.float32)
    tgt_m = jax.random.normal(k4, (2, 3, 250, 512), dtype=jnp.float32)
    loss_m = jax.block_until_ready(age_mse_loss(out_m, tgt_m))
    ref_m = jnp.mean((out_m - tgt_m) ** 2)
    assert jnp.allclose(loss_m, ref_m, rtol=1e-5, atol=1e-6), (loss_m, ref_m)

    # 3) bf16, size NOT 512-aligned: copy-free (prod(shape[:-1]), 513) view,
    #    full-last-dim blocks, native-dtype streaming, masked edge block --
    #    and no jnp.pad copy anywhere in the wrapper.
    shape = (4, 3, 301, 513)
    out_l = jax.random.normal(k5, shape, dtype=jnp.float32).astype(jnp.bfloat16)
    tgt_l = jax.random.normal(k6, shape, dtype=jnp.float32).astype(jnp.bfloat16)
    loss_l = jax.block_until_ready(age_mse_loss(out_l, tgt_l))
    ref_l = jnp.mean((out_l.astype(jnp.float32) - tgt_l.astype(jnp.float32)) ** 2)
    assert jnp.allclose(loss_l, ref_l, rtol=1e-4, atol=1e-6), (loss_l, ref_l)

    print("KERNEL_OK")
</pallas_src>

<mosaic_0001>
module attributes {stable_mosaic.version = 11 : i64} {
  func.func @_mse_kernel(%arg0: i32, %arg1: i32, %arg2: memref<4x512xf32, #tpu.memory_space<vmem>>, %arg3: memref<4x512xf32, #tpu.memory_space<vmem>>, %arg4: memref<1x1xf32, #tpu.memory_space<smem>>, %arg5: memref<1x512xf32, #tpu.memory_space<vmem>>) attributes {dimension_semantics = [#tpu.dimension_semantics<parallel>, #tpu.dimension_semantics<arbitrary>], iteration_bounds = array<i64: 1, 1>, scalar_prefetch = 0 : i64, scratch_operands = 1 : i64, tpu.core_type = #tpu.core_type<tc>, window_params = [{transform_indices = @transform_0, window_bounds = array<i64: 4, 512>}, {transform_indices = @transform_1, window_bounds = array<i64: 4, 512>}, {transform_indices = @transform_2, window_bounds = array<i64: 1, 1>}]} {
    %c0_i32 = arith.constant 0 : i32
    %0 = arith.cmpi eq, %arg1, %c0_i32 : i32
    %1 = arith.extui %0 : i1 to i32
    %c0_i32_0 = arith.constant 0 : i32
    %2 = arith.cmpi ne, %1, %c0_i32_0 : i32
    scf.if %2 {
      %cst = arith.constant 0.000000e+00 : f32
      %16 = vector.broadcast %cst : f32 to vector<1x512xf32>
      %c0 = arith.constant 0 : index
      %c0_7 = arith.constant 0 : index
      %17 = vector.load %arg5[%c0, %c0_7] : memref<1x512xf32, #tpu.memory_space<vmem>>, vector<1x512xf32>
      tpu.vector_store %arg5[%c0, %c0_7], %16 {strides = array<i32>} : memref<1x512xf32, #tpu.memory_space<vmem>>, vector<1x512xf32>,
    } else {
    }
    %c1_i32 = arith.constant 1 : i32
    %3 = arith.muli %arg0, %c1_i32 : i32
    %4 = arith.addi %3, %arg1 : i32
    %c4_i32 = arith.constant 4 : i32
    %5 = arith.muli %4, %c4_i32 : i32
    %c4_i32_1 = arith.constant 4 : i32
    %6 = arith.addi %5, %c4_i32_1 : i32
    %c4_i32_2 = arith.constant 4 : i32
    %7 = arith.cmpi sgt, %6, %c4_i32_2 : i32
    %true = arith.constant true
    %8 = arith.xori %7, %true : i1
    %9 = arith.extui %8 : i1 to i32
    %c0_i32_3 = arith.constant 0 : i32
    %10 = arith.cmpi ne, %9, %c0_i32_3 : i32
    scf.if %10 {
      %c0 = arith.constant 0 : index
      %c0_7 = arith.constant 0 : index
      %16 = vector.load %arg2[%c0, %c0_7] : memref<4x512xf32, #tpu.memory_space<vmem>>, vector<4x512xf32>
      %c0_8 = arith.constant 0 : index
      %c0_9 = arith.constant 0 : index
      %17 = vector.load %arg3[%c0_8, %c0_9] : memref<4x512xf32, #tpu.memory_space<vmem>>, vector<4x512xf32>
      %18 = arith.subf %16, %17 : vector<4x512xf32>
      %c0_10 = arith.constant 0 : index
      %c0_11 = arith.constant 0 : index
      %19 = vector.load %arg5[%c0_10, %c0_11] : memref<1x512xf32, #tpu.memory_space<vmem>>, vector<1x512xf32>
      %20 = arith.mulf %18, %18 : vector<4x512xf32>
      %cst = arith.constant dense<0.000000e+00> : vector<512xf32>
      %21 = vector.multi_reduction <add>, %20, %cst [0] : vector<4x512xf32> to vector<512xf32>
      %22 = vector.shape_cast %21 : vector<512xf32> to vector<1x512xf32>
      %23 = arith.addf %19, %22 : vector<1x512xf32>
      %c0_12 = arith.constant 0 : index
      %c0_13 = arith.constant 0 : index
      %24 = vector.load %arg5[%c0_12, %c0_13] : memref<1x512xf32, #tpu.memory_space<vmem>>, vector<1x512xf32>
      tpu.vector_store %arg5[%c0_12, %c0_13], %23 {strides = array<i32>} : memref<1x512xf32, #tpu.memory_space<vmem>>, vector<1x512xf32>,
    } else {
    }
    %11 = arith.extui %7 : i1 to i32
    %c0_i32_4 = arith.constant 0 : i32
    %12 = arith.cmpi ne, %11, %c0_i32_4 : i32
    scf.if %12 {
      %c0 = arith.constant 0 : index
      %c0_7 = arith.constant 0 : index
      %16 = vector.load %arg2[%c0, %c0_7] : memref<4x512xf32, #tpu.memory_space<vmem>>, vector<4x512xf32>
      %c0_8 = arith.constant 0 : index
      %c0_9 = arith.constant 0 : index
      %17 = vector.load %arg3[%c0_8, %c0_9] : memref<4x512xf32, #tpu.memory_space<vmem>>, vector<4x512xf32>
      %18 = arith.subf %16, %17 : vector<4x512xf32>
      %19 = tpu.iota {dimensions = array<i32: 0>} : vector<4x512xi32>
      %20 = vector.broadcast %5 : i32 to vector<4x512xi32>
      %21 = arith.addi %20, %19 : vector<4x512xi32>
      %c4_i32_10 = arith.constant 4 : i32
      %22 = vector.broadcast %c4_i32_10 : i32 to vector<4x512xi32>
      %23 = arith.cmpi slt, %21, %22 : vector<4x512xi32>
      %cst = arith.constant 0.000000e+00 : f32
      %24 = vector.broadcast %cst : f32 to vector<4x512xf32>
      %25 = arith.select %23, %18, %24 : vector<4x512xi1>, vector<4x512xf32>
      %c0_11 = arith.constant 0 : index
      %c0_12 = arith.constant 0 : index
      %26 = vector.load %arg5[%c0_11, %c0_12] : memref<1x512xf32, #tpu.memory_space<vmem>>, vector<1x512xf32>
      %27 = arith.mulf %25, %25 : vector<4x512xf32>
      %cst_13 = arith.constant dense<0.000000e+00> : vector<512xf32>
      %28 = vector.multi_reduction <add>, %27, %cst_13 [0] : vector<4x512xf32> to vector<512xf32>
      %29 = vector.shape_cast %28 : vector<512xf32> to vector<1x512xf32>
      %30 = arith.addf %26, %29 : vector<1x512xf32>
      %c0_14 = arith.constant 0 : index
      %c0_15 = arith.constant 0 : index
      %31 = vector.load %arg5[%c0_14, %c0_15] : memref<1x512xf32, #tpu.memory_space<vmem>>, vector<1x512xf32>
      tpu.vector_store %arg5[%c0_14, %c0_15], %30 {strides = array<i32>} : memref<1x512xf32, #tpu.memory_space<vmem>>, vector<1x512xf32>,
    } else {
    }
    %c0_i32_5 = arith.constant 0 : i32
    %13 = arith.cmpi eq, %arg1, %c0_i32_5 : i32
    %14 = arith.extui %13 : i1 to i32
    %c0_i32_6 = arith.constant 0 : i32
    %15 = arith.cmpi ne, %14, %c0_i32_6 : i32
    scf.if %15 {
      %c0 = arith.constant 0 : index
      %c0_7 = arith.constant 0 : index
      %16 = vector.load %arg5[%c0, %c0_7] : memref<1x512xf32, #tpu.memory_space<vmem>>, vector<1x512xf32>
      %17 = vector.shape_cast %16 : vector<1x512xf32> to vector<1x1x512xf32>
      %cst = arith.constant dense<0.000000e+00> : vector<1xf32>
      %18 = vector.multi_reduction <add>, %17, %cst [1, 2] : vector<1x1x512xf32> to vector<1xf32>
      %19 = vector.shape_cast %18 : vector<1xf32> to vector<1x1x1xf32>
      %20 = vector.extract %19[0, 0, 0] : f32 from vector<1x1x1xf32>
      %c0_8 = arith.constant 0 : index
      %c0_9 = arith.constant 0 : index
      %21 = memref.load %arg4[%c0_8, %c0_9] : memref<1x1xf32, #tpu.memory_space<smem>>
      memref.store %20, %arg4[%c0_8, %c0_9] : memref<1x1xf32, #tpu.memory_space<smem>>
    } else {
    }
    return
  }
  func.func @transform_0(%arg0: i32, %arg1: i32) -> (i32, i32) {
    %c1_i32 = arith.constant 1 : i32
    %0 = arith.muli %arg0, %c1_i32 : i32
    %1 = arith.addi %0, %arg1 : i32
    %c0_i32 = arith.constant 0 : i32
    %2 = arith.minsi %1, %c0_i32 : i32
    %c0_i32_0 = arith.constant 0 : i32
    %c0_i32_1 = arith.constant 0 : i32
    return %2, %c0_i32_0 : i32, i32
  }
  func.func @transform_1(%arg0: i32, %arg1: i32) -> (i32, i32) {
    %c1_i32 = arith.constant 1 : i32
    %0 = arith.muli %arg0, %c1_i32 : i32
    %1 = arith.addi %0, %arg1 : i32
    %c0_i32 = arith.constant 0 : i32
    %2 = arith.minsi %1, %c0_i32 : i32
    %c0_i32_0 = arith.constant 0 : i32
    %c0_i32_1 = arith.constant 0 : i32
    return %2, %c0_i32_0 : i32, i32
  }
  func.func @transform_2(%arg0: i32, %arg1: i32) -> (i32, i32) {
    %c0_i32 = arith.constant 0 : i32
    %c0_i32_0 = arith.constant 0 : i32
    return %arg0, %c0_i32 : i32, i32
  }
}

</mosaic_0001>

<llo_original>
// kernel: tpu_custom_call.1
$region0: #{tpu_custom_call.1}
  #allocation0 [shape = 'u32[]', space=smem, size = 0x4, offset = 0x4, fixed_abs, tag = 'smem constant byte address 0x4 - core index']
  #allocation1 [shape = 'u32[72,128]{1,0:T(1,128)}', space=vmem, size = 0x9000, scoped, tag = 'internal scratch']
  #allocation2 [shape = 'f32[1,512]{1,0:T(1,128)}', space=vmem, size = 0x800, scoped, tag = 'scratch operand']
  %s0 = inlined_call_operand.hbm [shape: f32[4,512], index: 0, kind: input, shape index: {}]
  %s1 = inlined_call_operand.hbm [shape: f32[4,512], index: 1, kind: input, shape index: {}]
  %s2 = inlined_call_operand.hbm [shape: f32[1,1], index: 2, kind: output, shape index: {}]
  %s3 = sld [smem:[#allocation0]]
  $region42: #{tpu_custom_call.1} parent=0
    _
  %s5 = ssub.s32 1, %s3
  %s6 = scalar_select 0, %s5, %s3
  $region1: #{tpu_custom_call.1} parent=0
    #allocation3 [shape = 'u8[8192]{0}', space=vmem, size = 0x2000, scoped, tag = 'input window, operand 0, single buffered']
    #allocation4 [shape = 's32[1]{0}', space=sflag, size = 0x4, scoped, tag = 'scoped memory for tpu_custom_call.1']
    #allocation5 [shape = 's32[1]{0}', space=sflag, size = 0x4, scoped, tag = 'scoped memory for tpu_custom_call.1']
    #allocation6 [shape = 'u8[8192]{0}', space=vmem, size = 0x2000, scoped, tag = 'input window, operand 1, single buffered']
    #allocation7 [shape = 's32[1]{0}', space=sflag, size = 0x4, scoped, tag = 'scoped memory for tpu_custom_call.1']
    #allocation8 [shape = 'u8[512]{0}', space=smem, size = 0x200, scoped, tag = 'output window, operand 0, single buffered']
    %7 = vsyncpa [#allocation4], 0
    %8 = vsyncpa [#allocation7], 0
    %9 = vsyncpa [#allocation5], 0
    // Predicated region
    $region2: #{tpu_custom_call.1} parent=1 // pred_check
      _
    $region3: #{tpu_custom_call.1} parent=1 // pred_check_branch
      %11 = sbr.rel (0) target = $region5
    $region4: #{tpu_custom_call.1} parent=1 // pred_region
      %s12 = sadd.s32 0, 0
      %p13 = scmp.lt.s32.totalorder %s12, 0
      %s14 = scalar_select %p13, %s12, 0
      %16 = vsyncadd [#allocation4], 0
      %s17 = smul.addr %s14, 4
      %s18 = smul.addr %s17, 4
      %s19 = scalar_lea.hbm %s0, %s18
      %s21 = sshll.u32 %s19, 4
      %s22 = int_to_ptr.hbm [resolvable:$true] %s21
      %s23 = sshll.u32 [#allocation3], 4
      %s24 = int_to_ptr.vmem [resolvable:$true] %s23
      %26 = dma.hbm_to_vmem [thread:$0]  %s22, 256, %s24, [#allocation4]
    $region5: #{tpu_custom_call.1} parent=1 // pred_fallthru
      _
    // Predicated region
    $region6: #{tpu_custom_call.1} parent=1 // pred_check
      _
    $region7: #{tpu_custom_call.1} parent=1 // pred_check_branch
      %28 = sbr.rel (0) target = $region9
    $region8: #{tpu_custom_call.1} parent=1 // pred_region
      %s29 = sadd.s32 0, 0
      %p30 = scmp.lt.s32.totalorder %s29, 0
      %s31 = scalar_select %p30, %s29, 0
      %33 = vsyncadd [#allocation7], 0
      %s34 = smul.addr %s31, 4
      %s35 = smul.addr %s34, 4
      %s36 = scalar_lea.hbm %s1, %s35
      %s38 = sshll.u32 %s36, 4
      %s39 = int_to_ptr.hbm [resolvable:$true] %s38
      %s40 = sshll.u32 [#allocation6], 4
      %s41 = int_to_ptr.vmem [resolvable:$true] %s40
      %43 = dma.hbm_to_vmem [thread:$0]  %s39, 256, %s41, [#allocation7]
    $region9: #{tpu_custom_call.1} parent=1 // pred_fallthru
      _
    // Predicated region
    $region10: #{tpu_custom_call.1} parent=1 // pred_check
      _
    $region11: #{tpu_custom_call.1} parent=1 // pred_check_branch
      %45 = sbr.rel (0) target = $region13
    $region12: #{tpu_custom_call.1} parent=1 // pred_region
      %47 = dma.done [#allocation4], 256
    $region13: #{tpu_custom_call.1} parent=1 // pred_fallthru
      _
    // Predicated region
    $region14: #{tpu_custom_call.1} parent=1 // pred_check
      _
    $region15: #{tpu_custom_call.1} parent=1 // pred_check_branch
      %49 = sbr.rel (0) target = $region17
    $region16: #{tpu_custom_call.1} parent=1 // pred_region
      %51 = dma.done [#allocation7], 256
    $region17: #{tpu_custom_call.1} parent=1 // pred_fallthru
      _
    %s52 = sadd.s32 0, 0
    %p53 = scmp.lt.s32.totalorder %s52, 0
    %s54 = scalar_select %p53, %s52, 0
    %s55 = sadd.s32 0, 0
    %p56 = scmp.lt.s32.totalorder %s55, 0
    %s57 = scalar_select %p56, %s55, 0
    %p58 = scmp.eq.s32.totalorder 0, 0
    // Predicated region
    $region18: #{tpu_custom_call.1} parent=1 // pred_check
      %p59 = pneg %p58
    $region19: #{tpu_custom_call.1} parent=1 // pred_check_branch
      %61 = sbr.rel (%p59) target = $region21
    $region20: #{tpu_custom_call.1} parent=1 // pred_region
      %v62 = vlaneseq
      %vm63 = vcmp.ge.s32.totalorder %v62, 0
      %vm64 = vcmp.lt.s32.totalorder %v62, 512
      %vm65 = vmand %vm63, %vm64
      %66 = vst.msk [vmem:[#allocation2] sm:$0xf] %vm65, 0.0
    $region21: #{tpu_custom_call.1} parent=1 // pred_fallthru
      _
    %s67 = sadd.s32 0, 0
    %s68 = smul.u32 %s67, 4
    %s69 = sadd.s32 %s68, 4
    %p70 = scmp.gt.s32.totalorder %s69, 4
    %p71 = scmp.le.s32.totalorder %s69, 4
    // Predicated region
    $region22: #{tpu_custom_call.1} parent=1 // pred_check
      %p72 = pneg %p71
    $region23: #{tpu_custom_call.1} parent=1 // pred_check_branch
      %74 = sbr.rel (%p72) target = $region25
    $region24: #{tpu_custom_call.1} parent=1 // pred_region
      %v75 = vld [vmem:[#allocation3] sm:$0xff]
      %v76 = vld [vmem:[#allocation3 + $0x8] sm:$0xff]
      %v77 = vld [vmem:[#allocation6] sm:$0xff]
      %v78 = vld [vmem:[#allocation6 + $0x8] sm:$0xff]
      %v79 = vsub.f32 %v75, %v77
      %v80 = vsub.f32 %v76, %v78
      %v81 = vld [vmem:[#allocation2] sm:$0xf]
      %v82 = vmul.f32 %v79, %v79
      %v83 = vmul.f32 %v80, %v80
      %86 = vst [vmem:[#allocation1] ss:$2 sm:$0xff] %v82
      %s87 = scalar_lea.vmem [#allocation1], 16
      %88 = vst [vmem:[%s87] ss:$2 sm:$0xff] %v83
      %v89 = vld.sshfl [vmem:[#allocation1] sm:$0xff pattern:$0x75316420]
      %v90 = vld.sshfl [vmem:[#allocation1 + $0x8] sm:$0xff pattern:$0x75316420]
      %v91 = vld.sshfl [vmem:[#allocation1 + $0x10] sm:$0xff pattern:$0x75316420]
      %v92 = vld.sshfl [vmem:[#allocation1 + $0x18] sm:$0xff pattern:$0x75316420]
      %vm97 = vcmask 1043456
      %v98 = vsel %vm97, %v89, 0.0
      %v99 = vrot.slane %v98, 4
      %v100 = vadd.f32 %v98, %v99
      %v101 = vrot.slane %v100, 2
      %v102 = vadd.f32 %v100, %v101
      %v103 = vrot.slane %v102, 1
      %v104 = vadd.f32 %v102, %v103
      %v105 = vsel %vm97, %v90, 0.0
      %v106 = vrot.slane %v105, 4
      %v107 = vadd.f32 %v105, %v106
      %v108 = vrot.slane %v107, 2
      %v109 = vadd.f32 %v107, %v108
      %v110 = vrot.slane %v109, 1
      %v111 = vadd.f32 %v109, %v110
      %v112 = vsel %vm97, %v91, 0.0
      %v113 = vrot.slane %v112, 4
      %v114 = vadd.f32 %v112, %v113
      %v115 = vrot.slane %v114, 2
      %v116 = vadd.f32 %v114, %v115
      %v117 = vrot.slane %v116, 1
      %v118 = vadd.f32 %v116, %v117
      %v119 = vsel %vm97, %v92, 0.0
      %v120 = vrot.slane %v119, 4
      %v121 = vadd.f32 %v119, %v120
      %v122 = vrot.slane %v121, 2
      %v123 = vadd.f32 %v121, %v122
      %v124 = vrot.slane %v123, 1
      %v125 = vadd.f32 %v123, %v124
      %v130 = vrot.slane %v111, 7
      %v131 = vrot.slane %v118, 6
      %v132 = vrot.slane %v125, 5
      %vm133 = vcmask 1040384
      %v134 = vsel %vm133, %v104, %v130
      %vm135 = vcmask 1042434
      %v136 = vsel %vm135, %v131, %v132
      %vm137 = vcmask 1041408
      %v138 = vsel %vm137, %v134, %v136
      %v140 = vadd.f32 %v81, %v138
      %v141 = vlaneseq
      %vm142 = vcmp.ge.s32.totalorder %v141, 0
      %vm143 = vcmp.lt.s32.totalorder %v141, 512
      %vm144 = vmand %vm142, %vm143
      %145 = vst.msk [vmem:[#allocation2] sm:$0xf] %vm144, %v140
    $region25: #{tpu_custom_call.1} parent=1 // pred_fallthru
      _
    // Predicated region
    $region26: #{tpu_custom_call.1} parent=1 // pred_check
      %p146 = pneg %p70
    $region27: #{tpu_custom_call.1} parent=1 // pred_check_branch
      %148 = sbr.rel (%p146) target = $region29
    $region28: #{tpu_custom_call.1} parent=1 // pred_region
      %v149 = vld [vmem:[#allocation3] sm:$0xff]
      %v150 = vld [vmem:[#allocation3 + $0x8] sm:$0xff]
      %v151 = vld [vmem:[#allocation6] sm:$0xff]
      %v152 = vld [vmem:[#allocation6 + $0x8] sm:$0xff]
      %v153 = vsub.f32 %v149, %v151
      %v154 = vsub.f32 %v150, %v152
      %v155 = vlaneseq
      %v156 = vshrl.u32 %v155, 7
      %v157 = vstv %s68
      %v158 = vadd.s32 %v157, %v156
      %vm159 = vcmp.lt.s32.totalorder %v158, 4
      %162 = vst [vmem:[#allocation1] ss:$2 sm:$0xff] %v153
      %s163 = scalar_lea.vmem [#allocation1], 16
      %164 = vst [vmem:[%s163] ss:$2 sm:$0xff] %v154
      %v165 = vld.sshfl [vmem:[#allocation1] sm:$0xff pattern:$0x75316420]
      %v166 = vld.sshfl [vmem:[#allocation1 + $0x8] sm:$0xff pattern:$0x75316420]
      %v167 = vld.sshfl [vmem:[#allocation1 + $0x10] sm:$0xff pattern:$0x75316420]
      %v168 = vld.sshfl [vmem:[#allocation1 + $0x18] sm:$0xff pattern:$0x75316420]
      %v173 = vsel %vm159, %v165, 0.0
      %v174 = vsel %vm159, %v166, 0.0
      %v175 = vsel %vm159, %v167, 0.0
      %v176 = vsel %vm159, %v168, 0.0
      %v177 = vld [vmem:[#allocation2] sm:$0xf]
      %v178 = vmul.f32 %v173, %v173
      %v179 = vmul.f32 %v174, %v174
      %v180 = vmul.f32 %v175, %v175
      %v181 = vmul.f32 %v176, %v176
      %vm182 = vcmask 1043456
      %v183 = vsel %vm182, %v178, 0.0
      %v184 = vrot.slane %v183, 4
      %v185 = vadd.f32 %v183, %v184
      %v186 = vrot.slane %v185, 2
      %v187 = vadd.f32 %v185, %v186
      %v188 = vrot.slane %v187, 1
      %v189 = vadd.f32 %v187, %v188
      %v190 = vsel %vm182, %v179, 0.0
      %v191 = vrot.slane %v190, 4
      %v192 = vadd.f32 %v190, %v191
      %v193 = vrot.slane %v192, 2
      %v194 = vadd.f32 %v192, %v193
      %v195 = vrot.slane %v194, 1
      %v196 = vadd.f32 %v194, %v195
      %v197 = vsel %vm182, %v180, 0.0
      %v198 = vrot.slane %v197, 4
      %v199 = vadd.f32 %v197, %v198
      %v200 = vrot.slane %v199, 2
      %v201 = vadd.f32 %v199, %v200
      %v202 = vrot.slane %v201, 1
      %v203 = vadd.f32 %v201, %v202
      %v204 = vsel %vm182, %v181, 0.0
      %v205 = vrot.slane %v204, 4
      %v206 = vadd.f32 %v204, %v205
      %v207 = vrot.slane %v206, 2
      %v208 = vadd.f32 %v206, %v207
      %v209 = vrot.slane %v208, 1
      %v210 = vadd.f32 %v208, %v209
      %v215 = vrot.slane %v196, 7
      %v216 = vrot.slane %v203, 6
      %v217 = vrot.slane %v210, 5
      %vm218 = vcmask 1040384
      %v219 = vsel %vm218, %v189, %v215
      %vm220 = vcmask 1042434
      %v221 = vsel %vm220, %v216, %v217
      %vm222 = vcmask 1041408
      %v223 = vsel %vm222, %v219, %v221
      %v225 = vadd.f32 %v177, %v223
      %v226 = vlaneseq
      %vm227 = vcmp.ge.s32.totalorder %v226, 0
      %vm228 = vcmp.lt.s32.totalorder %v226, 512
      %vm229 = vmand %vm227, %vm228
      %230 = vst.msk [vmem:[#allocation2] sm:$0xf] %vm229, %v225
    $region29: #{tpu_custom_call.1} parent=1 // pred_fallthru
      _
    // Predicated region
    $region30: #{tpu_custom_call.1} parent=1 // pred_check
      %p231 = pneg %p58
    $region31: #{tpu_custom_call.1} parent=1 // pred_check_branch
      %233 = sbr.rel (%p231) target = $region33
    $region32: #{tpu_custom_call.1} parent=1 // pred_region
      %v234 = vld [vmem:[#allocation2] sm:$0xf]
      %v236 = vperm.slane %v234, 0
      %v237 = vperm.slane %v234, 1
      %v238 = vperm.slane %v234, 2
      %v239 = vperm.slane %v234, 3
      %vm244 = vcmask 1040384
      %v245 = vsel %vm244, %v236, 0.0
      %v246 = vsel %vm244, %v237, 0.0
      %v247 = vadd.f32 %v245, %v246
      %v248 = vsel %vm244, %v238, 0.0
      %v249 = vadd.f32 %v247, %v248
      %v250 = vsel %vm244, %v239, 0.0
      %v251 = vadd.f32 %v249, %v250
      %252 = vadd.xlane.f32.xlu0 %v251
      %v253 = vpop.xlane.xlu0 %252
      %v254 = vrot.slane %v253, 4
      %v255 = vadd.f32 %v253, %v254
      %v256 = vrot.slane %v255, 2
      %v257 = vadd.f32 %v255, %v256
      %v258 = vrot.slane %v257, 1
      %v259 = vadd.f32 %v257, %v258
      %s260 = vtos %v259
      %s261 = scalar_lea.smem [#allocation8], 0
      %262 = sst [smem:[%s261]] %s260
    $region33: #{tpu_custom_call.1} parent=1 // pred_fallthru
      _
    // Predicated region
    $region34: #{tpu_custom_call.1} parent=1 // pred_check
      _
    $region35: #{tpu_custom_call.1} parent=1 // pred_check_branch
      %264 = sbr.rel (0) target = $region37
    $region36: #{tpu_custom_call.1} parent=1 // pred_region
      %266 = vsyncadd [#allocation5], 0
      %s268 = sshll.u32 %s2, 4
      %s269 = int_to_ptr.hbm [resolvable:$true] %s268
      %271 = dma.smem_to_hbm [#allocation8], 16, %s269, [#allocation5]
    $region37: #{tpu_custom_call.1} parent=1 // pred_fallthru
      _
    // Predicated region
    $region38: #{tpu_custom_call.1} parent=1 // pred_check
      _
    $region39: #{tpu_custom_call.1} parent=1 // pred_check_branch
      %273 = sbr.rel (0) target = $region41
    $region40: #{tpu_custom_call.1} parent=1 // pred_region
      %275 = dma.done [#allocation5], 16
    $region41: #{tpu_custom_call.1} parent=1 // pred_fallthru
      _
    %276 = sfence
    %277 = vsyncpa [#allocation4], 1
    %278 = vsyncpa [#allocation7], 1
    %279 = vsyncpa [#allocation5], 1

</llo_original>
